<compile_context>
chip_gen: v7x
topology: tpu7x:2x2x1
jax: 0.10.0
libtpu: 0.0.40
codegen_flags: <defaults>
</compile_context>

<pallas_src>
import functools

import jax
import jax.numpy as jnp
from jax.experimental import pallas as pl
from jax.experimental.pallas import tpu as pltpu


def _tabular_row_encoder_kernel(
    x_ref, wemb_ref, out_ref,
    *, segments, cat_cols, vocab_offsets, emb_offsets, emb_dims,
    total_vocab, pad_width,
):
    x = x_ref[...]                                            # (TB, input_dim) f32
    tb = x.shape[0]

    # ---- fused embedding lookup: one multi-hot @ block-diagonal table --------
    iota_v = jax.lax.broadcasted_iota(jnp.int32, (tb, total_vocab), 1)
    onehot = jnp.zeros((tb, total_vocab), jnp.float32)
    for f, col in enumerate(cat_cols):
        idx = x[:, col:col + 1].astype(jnp.int32) + vocab_offsets[f]   # (TB, 1)
        onehot = onehot + (iota_v == idx).astype(jnp.float32)
    # (TB, total_emb): column range [emb_offsets[f], +emb_dims[f]) is feature f.
    emb_all = jnp.dot(onehot, wemb_ref[...], preferred_element_type=jnp.float32)

    # ---- assemble the output row in column order, single lane-dense store ----
    cols = []
    for kind, a, b in segments:
        if kind == "num":
            cols.append(x[:, a:b])
        else:  # "cat": a = categorical feature index
            f = a
            cols.append(emb_all[:, emb_offsets[f]:emb_offsets[f] + emb_dims[f]])
    if pad_width > 0:
        cols.append(jnp.zeros((tb, pad_width), jnp.float32))
    out_ref[...] = jnp.concatenate(cols, axis=1)


def tabular_row_encoder(x, emb_tables, *, cat_idxs, cat_dims, cat_emb_dims,
                        batch_tile=128):
    """x: (B, input_dim) f32 (categorical columns hold integer codes as floats).

    emb_tables[f]: (cat_dims[f], cat_emb_dims[f]) f32 table for cat_idxs[f].
    Returns (B, post_embed_dim) f32, matching TabularRowEncoder.forward.
    """
    B, input_dim = x.shape

    # skip_embedding path of the module.
    if not cat_idxs or not cat_dims:
        return x

    if isinstance(cat_emb_dims, int):
        cat_emb_dims = [cat_emb_dims] * len(cat_idxs)
    assert len(cat_emb_dims) == len(cat_dims) == len(cat_idxs)

    # The PyTorch forward requires cat_idxs sorted ascending; sort jointly
    # (identity when already sorted, mirroring the module constructor).
    order = sorted(range(len(cat_idxs)), key=lambda i: cat_idxs[i])
    cat_idxs = [cat_idxs[i] for i in order]
    cat_dims = [cat_dims[i] for i in order]
    cat_emb_dims = [cat_emb_dims[i] for i in order]
    emb_tables = [emb_tables[i] for i in order]

    n_cat = len(cat_idxs)
    total_vocab = sum(cat_dims)
    total_emb = sum(cat_emb_dims)
    vocab_offsets, emb_offsets = [], []
    vo = eo = 0
    for cd, ed in zip(cat_dims, cat_emb_dims):
        vocab_offsets.append(vo)
        emb_offsets.append(eo)
        vo += cd
        eo += ed

    # Block-diagonal fused embedding table (total_vocab, total_emb).
    w_fused = jnp.zeros((total_vocab, total_emb), jnp.float32)
    for f, tbl in enumerate(emb_tables):
        w_fused = w_fused.at[
            vocab_offsets[f]:vocab_offsets[f] + cat_dims[f],
            emb_offsets[f]:emb_offsets[f] + cat_emb_dims[f],
        ].set(tbl.astype(jnp.float32))

    # Output column layout (same segment order as the PyTorch forward).
    segments = []
    prev = -1
    for f, ci in enumerate(cat_idxs):
        if ci > prev + 1:
            segments.append(("num", prev + 1, ci))
        segments.append(("cat", f, f))
        prev = ci
    if prev + 1 < input_dim:
        segments.append(("num", prev + 1, input_dim))

    post_embed_dim = input_dim + total_emb - n_cat
    out_pad = max(128, ((post_embed_dim + 127) // 128) * 128)  # lane-dense output
    pad_width = out_pad - post_embed_dim

    # Pad batch up to a multiple of batch_tile (keeps the tile MXU-sized).
    assert batch_tile % 8 == 0, "batch_tile must be a multiple of 8"
    n_tiles = (B + batch_tile - 1) // batch_tile
    b_pad = n_tiles * batch_tile
    x_pad = x.astype(jnp.float32)
    if b_pad != B:
        x_pad = jnp.pad(x_pad, ((0, b_pad - B), (0, 0)))  # code 0 is a valid index

    kernel = pl.pallas_call(
        functools.partial(
            _tabular_row_encoder_kernel,
            segments=tuple(segments),
            cat_cols=tuple(cat_idxs),
            vocab_offsets=tuple(vocab_offsets),
            emb_offsets=tuple(emb_offsets),
            emb_dims=tuple(cat_emb_dims),
            total_vocab=total_vocab,
            pad_width=pad_width,
        ),
        out_shape=jax.ShapeDtypeStruct((b_pad, out_pad), jnp.float32),
        grid_spec=pltpu.PrefetchScalarGridSpec(
            num_scalar_prefetch=0,
            grid=(n_tiles,),
            in_specs=[
                pl.BlockSpec((batch_tile, input_dim), lambda i: (i, 0)),
                # constant index_map -> table stays resident in VMEM
                pl.BlockSpec((total_vocab, total_emb), lambda i: (0, 0)),
            ],
            out_specs=pl.BlockSpec((batch_tile, out_pad), lambda i: (i, 0)),
        ),
        compiler_params=pltpu.CompilerParams(
            dimension_semantics=("parallel",),
        ),
    )
    out = kernel(x_pad, w_fused)
    return out[:B, :post_embed_dim]


def _reference(x, emb_tables, cat_idxs):
    """Pure-JAX reference matching TabularRowEncoder.forward."""
    cols = []
    prev = -1
    for f, ci in enumerate(cat_idxs):
        if ci > prev + 1:
            cols.append(x[:, prev + 1:ci])
        idx = x[:, ci].astype(jnp.int32)
        cols.append(emb_tables[f][idx])
        prev = ci
    if prev + 1 < x.shape[1]:
        cols.append(x[:, prev + 1:])
    return jnp.concatenate(cols, axis=1)


if __name__ == "__main__":
    key = jax.random.PRNGKey(0)
    k_x, k_e, k_c = jax.random.split(key, 3)

    B, input_dim = 8, 16
    cat_idxs = [2, 5, 11]
    cat_dims = [7, 13, 5]
    cat_emb_dims = [3, 4, 2]

    # Continuous features + integer categorical codes stored as floats.
    x = jax.random.normal(k_x, (B, input_dim), jnp.float32)
    code_keys = jax.random.split(k_c, len(cat_idxs))
    for ck, ci, cd in zip(code_keys, cat_idxs, cat_dims):
        codes = jax.random.randint(ck, (B,), 0, cd)
        x = x.at[:, ci].set(codes.astype(jnp.float32))

    emb_keys = jax.random.split(k_e, len(cat_idxs))
    emb_tables = [
        jax.random.normal(ek, (cd, ed), jnp.float32)
        for ek, cd, ed in zip(emb_keys, cat_dims, cat_emb_dims)
    ]

    out = tabular_row_encoder(
        x, emb_tables,
        cat_idxs=cat_idxs, cat_dims=cat_dims, cat_emb_dims=cat_emb_dims,
        batch_tile=128,
    )
    out = jax.block_until_ready(out)

    ref = _reference(x, emb_tables, cat_idxs)
    assert out.shape == ref.shape, (out.shape, ref.shape)
    assert jnp.allclose(out, ref, atol=1e-5, rtol=1e-5)
    print("KERNEL_OK")
</pallas_src>

<mosaic_0001>
module attributes {stable_mosaic.version = 11 : i64} {
  func.func @_tabular_row_encoder_kernel(%arg0: i32, %arg1: memref<128x16xf32, #tpu.memory_space<vmem>>, %arg2: memref<25x9xf32, #tpu.memory_space<vmem>>, %arg3: memref<128x128xf32, #tpu.memory_space<vmem>>) attributes {dimension_semantics = [#tpu.dimension_semantics<parallel>], iteration_bounds = array<i64: 1>, scalar_prefetch = 0 : i64, scratch_operands = 0 : i64, tpu.core_type = #tpu.core_type<tc>, window_params = [{transform_indices = @transform_0, window_bounds = array<i64: 128, 16>}, {pipeline_mode = #tpu.pipeline_mode<synchronous>, transform_indices = @transform_1, window_bounds = array<i64: 25, 9>}, {transform_indices = @transform_2, window_bounds = array<i64: 128, 128>}]} {
    %c0 = arith.constant 0 : index
    %c0_0 = arith.constant 0 : index
    %0 = vector.load %arg1[%c0, %c0_0] : memref<128x16xf32, #tpu.memory_space<vmem>>, vector<128x16xf32>
    %1 = tpu.iota {dimensions = array<i32: 1>} : vector<128x25xi32>
    %cst = arith.constant 0.000000e+00 : f32
    %2 = vector.broadcast %cst : f32 to vector<128x25xf32>
    %3 = vector.extract_strided_slice %0 {offsets = [0, 2], sizes = [128, 1], strides = [1, 1]} : vector<128x16xf32> to vector<128x1xf32>
    %4 = arith.fptosi %3 : vector<128x1xf32> to vector<128x1xi32>
    %c0_i32 = arith.constant 0 : i32
    %5 = vector.broadcast %c0_i32 : i32 to vector<128x1xi32>
    %6 = arith.addi %4, %5 : vector<128x1xi32>
    %7 = vector.broadcast %6 : vector<128x1xi32> to vector<128x25xi32>
    %8 = arith.cmpi eq, %1, %7 : vector<128x25xi32>
    %9 = arith.extui %8 : vector<128x25xi1> to vector<128x25xi32>
    %10 = arith.sitofp %9 : vector<128x25xi32> to vector<128x25xf32>
    %11 = arith.addf %2, %10 : vector<128x25xf32>
    %12 = vector.extract_strided_slice %0 {offsets = [0, 5], sizes = [128, 1], strides = [1, 1]} : vector<128x16xf32> to vector<128x1xf32>
    %13 = arith.fptosi %12 : vector<128x1xf32> to vector<128x1xi32>
    %c7_i32 = arith.constant 7 : i32
    %14 = vector.broadcast %c7_i32 : i32 to vector<128x1xi32>
    %15 = arith.addi %13, %14 : vector<128x1xi32>
    %16 = vector.broadcast %15 : vector<128x1xi32> to vector<128x25xi32>
    %17 = arith.cmpi eq, %1, %16 : vector<128x25xi32>
    %18 = arith.extui %17 : vector<128x25xi1> to vector<128x25xi32>
    %19 = arith.sitofp %18 : vector<128x25xi32> to vector<128x25xf32>
    %20 = arith.addf %11, %19 : vector<128x25xf32>
    %21 = vector.extract_strided_slice %0 {offsets = [0, 11], sizes = [128, 1], strides = [1, 1]} : vector<128x16xf32> to vector<128x1xf32>
    %22 = arith.fptosi %21 : vector<128x1xf32> to vector<128x1xi32>
    %c20_i32 = arith.constant 20 : i32
    %23 = vector.broadcast %c20_i32 : i32 to vector<128x1xi32>
    %24 = arith.addi %22, %23 : vector<128x1xi32>
    %25 = vector.broadcast %24 : vector<128x1xi32> to vector<128x25xi32>
    %26 = arith.cmpi eq, %1, %25 : vector<128x25xi32>
    %27 = arith.extui %26 : vector<128x25xi1> to vector<128x25xi32>
    %28 = arith.sitofp %27 : vector<128x25xi32> to vector<128x25xf32>
    %29 = arith.addf %20, %28 : vector<128x25xf32>
    %c0_1 = arith.constant 0 : index
    %c0_2 = arith.constant 0 : index
    %30 = vector.load %arg2[%c0_1, %c0_2] : memref<25x9xf32, #tpu.memory_space<vmem>>, vector<25x9xf32>
    %cst_3 = arith.constant dense<0.000000e+00> : vector<128x9xf32>
    %31 = tpu.matmul %29, %30, %cst_3 {dimension_numbers = #tpu.dot_dimension_numbers<[1], [0], [0], [1], [0, 0, 1, 1], [], []>} : vector<128x25xf32>, vector<25x9xf32>, vector<128x9xf32> -> vector<128x9xf32>
    %32 = vector.extract_strided_slice %0 {offsets = [0, 0], sizes = [128, 2], strides = [1, 1]} : vector<128x16xf32> to vector<128x2xf32>
    %33 = vector.extract_strided_slice %31 {offsets = [0, 0], sizes = [128, 3], strides = [1, 1]} : vector<128x9xf32> to vector<128x3xf32>
    %34 = vector.extract_strided_slice %0 {offsets = [0, 3], sizes = [128, 2], strides = [1, 1]} : vector<128x16xf32> to vector<128x2xf32>
    %35 = vector.extract_strided_slice %31 {offsets = [0, 3], sizes = [128, 4], strides = [1, 1]} : vector<128x9xf32> to vector<128x4xf32>
    %36 = vector.extract_strided_slice %0 {offsets = [0, 6], sizes = [128, 5], strides = [1, 1]} : vector<128x16xf32> to vector<128x5xf32>
    %37 = vector.extract_strided_slice %31 {offsets = [0, 7], sizes = [128, 2], strides = [1, 1]} : vector<128x9xf32> to vector<128x2xf32>
    %38 = vector.extract_strided_slice %0 {offsets = [0, 12], sizes = [128, 4], strides = [1, 1]} : vector<128x16xf32> to vector<128x4xf32>
    %cst_4 = arith.constant 0.000000e+00 : f32
    %39 = vector.broadcast %cst_4 : f32 to vector<128x106xf32>
    %40 = tpu.concatenate %32, %33, %34, %35, %36, %37, %38, %39 in 1 : vector<128x2xf32>, vector<128x3xf32>, vector<128x2xf32>, vector<128x4xf32>, vector<128x5xf32>, vector<128x2xf32>, vector<128x4xf32>, vector<128x106xf32> -> vector<128x128xf32>
    %c0_5 = arith.constant 0 : index
    %c0_6 = arith.constant 0 : index
    %41 = vector.load %arg3[%c0_5, %c0_6] : memref<128x128xf32, #tpu.memory_space<vmem>>, vector<128x128xf32>
    tpu.vector_store %arg3[%c0_5, %c0_6], %40 {strides = array<i32>} : memref<128x128xf32, #tpu.memory_space<vmem>>, vector<128x128xf32>,
    return
  }
  func.func @transform_0(%arg0: i32) -> (i32, i32) {
    %c0_i32 = arith.constant 0 : i32
    %c0_i32_0 = arith.constant 0 : i32
    return %arg0, %c0_i32 : i32, i32
  }
  func.func @transform_1(%arg0: i32) -> (i32, i32) {
    %c0_i32 = arith.constant 0 : i32
    %c0_i32_0 = arith.constant 0 : i32
    %c0_i32_1 = arith.constant 0 : i32
    return %c0_i32, %c0_i32_0 : i32, i32
  }
  func.func @transform_2(%arg0: i32) -> (i32, i32) {
    %c0_i32 = arith.constant 0 : i32
    %c0_i32_0 = arith.constant 0 : i32
    return %arg0, %c0_i32 : i32, i32
  }
}

</mosaic_0001>

<llo_original>
// kernel: tpu_custom_call.1
$region0: #{tpu_custom_call.1}
  #allocation0 [shape = 'u32[]', space=smem, size = 0x4, offset = 0x4, fixed_abs, tag = 'smem constant byte address 0x4 - core index']
  #allocation1 [shape = 'u32[144,128]{1,0:T(1,128)}', space=vmem, size = 0x12000, scoped, tag = 'internal scratch']
  %s0 = inlined_call_operand.vmem [shape: f32[128,16], index: 0, kind: input, shape index: {}]
  %s1 = inlined_call_operand.vmem [shape: f32[25,9], index: 1, kind: input, shape index: {}]
  %s2 = inlined_call_operand.hbm [shape: f32[128,128], index: 2, kind: output, shape index: {}]
  %s3 = sld [smem:[#allocation0]]
  $region18: #{tpu_custom_call.1} parent=0
    _
  %s5 = ssub.s32 1, %s3
  %s6 = scalar_select 0, %s5, %s3
  $region1: #{tpu_custom_call.1} parent=0
    #allocation2 [shape = 'u8[65536]{0}', space=vmem, size = 0x10000, scoped, tag = 'output window, operand 0, single buffered']
    #allocation3 [shape = 's32[1]{0}', space=sflag, size = 0x4, scoped, tag = 'scoped memory for tpu_custom_call.1']
    %7 = vsyncpa [#allocation3], 0
    // Predicated region
    $region2: #{tpu_custom_call.1} parent=1 // pred_check
      _
    $region3: #{tpu_custom_call.1} parent=1 // pred_check_branch
      %9 = sbr.rel (0) target = $region5
    $region4: #{tpu_custom_call.1} parent=1 // pred_region
      _
    $region5: #{tpu_custom_call.1} parent=1 // pred_fallthru
      _
    // Predicated region
    $region6: #{tpu_custom_call.1} parent=1 // pred_check
      _
    $region7: #{tpu_custom_call.1} parent=1 // pred_check_branch
      %11 = sbr.rel (0) target = $region9
    $region8: #{tpu_custom_call.1} parent=1 // pred_region
      _
    $region9: #{tpu_custom_call.1} parent=1 // pred_fallthru
      _
    %v12 = vld [vmem:[%s0] sm:$0xff]
    %v13 = vld [vmem:[%s0 + $0x8] sm:$0xff]
    %v14 = vld [vmem:[%s0 + $0x10] sm:$0xff]
    %v15 = vld [vmem:[%s0 + $0x18] sm:$0xff]
    %v16 = vld [vmem:[%s0 + $0x20] sm:$0xff]
    %v17 = vld [vmem:[%s0 + $0x28] sm:$0xff]
    %v18 = vld [vmem:[%s0 + $0x30] sm:$0xff]
    %v19 = vld [vmem:[%s0 + $0x38] sm:$0xff]
    %v20 = vld [vmem:[%s0 + $0x40] sm:$0xff]
    %v21 = vld [vmem:[%s0 + $0x48] sm:$0xff]
    %v22 = vld [vmem:[%s0 + $0x50] sm:$0xff]
    %v23 = vld [vmem:[%s0 + $0x58] sm:$0xff]
    %v24 = vld [vmem:[%s0 + $0x60] sm:$0xff]
    %v25 = vld [vmem:[%s0 + $0x68] sm:$0xff]
    %v26 = vld [vmem:[%s0 + $0x70] sm:$0xff]
    %v27 = vld [vmem:[%s0 + $0x78] sm:$0xff]
    %v28 = vlaneseq
    %v29 = vand.u32 %v28, 127
    %v30 = vcvt.f32.s32.to.zero.pseudo %v12
    %v31 = vcvt.f32.s32.to.zero.pseudo %v13
    %v32 = vcvt.f32.s32.to.zero.pseudo %v14
    %v33 = vcvt.f32.s32.to.zero.pseudo %v15
    %v34 = vcvt.f32.s32.to.zero.pseudo %v16
    %v35 = vcvt.f32.s32.to.zero.pseudo %v17
    %v36 = vcvt.f32.s32.to.zero.pseudo %v18
    %v37 = vcvt.f32.s32.to.zero.pseudo %v19
    %v38 = vcvt.f32.s32.to.zero.pseudo %v20
    %v39 = vcvt.f32.s32.to.zero.pseudo %v21
    %v40 = vcvt.f32.s32.to.zero.pseudo %v22
    %v41 = vcvt.f32.s32.to.zero.pseudo %v23
    %v42 = vcvt.f32.s32.to.zero.pseudo %v24
    %v43 = vcvt.f32.s32.to.zero.pseudo %v25
    %v44 = vcvt.f32.s32.to.zero.pseudo %v26
    %v45 = vcvt.f32.s32.to.zero.pseudo %v27
    %46 = vset.pattern.permute.xlu0 2
    %47 = vperm.xlu0 %46, %v30
    %v48 = vpop.permute.xlu0 %47
    %49 = vset.pattern.permute.xlu0 2
    %50 = vperm.xlu0 %49, %v31
    %v51 = vpop.permute.xlu0 %50
    %52 = vset.pattern.permute.xlu0 2
    %53 = vperm.xlu0 %52, %v32
    %v54 = vpop.permute.xlu0 %53
    %55 = vset.pattern.permute.xlu0 2
    %56 = vperm.xlu0 %55, %v33
    %v57 = vpop.permute.xlu0 %56
    %58 = vset.pattern.permute.xlu0 2
    %59 = vperm.xlu0 %58, %v34
    %v60 = vpop.permute.xlu0 %59
    %61 = vset.pattern.permute.xlu0 2
    %62 = vperm.xlu0 %61, %v35
    %v63 = vpop.permute.xlu0 %62
    %64 = vset.pattern.permute.xlu0 2
    %65 = vperm.xlu0 %64, %v36
    %v66 = vpop.permute.xlu0 %65
    %67 = vset.pattern.permute.xlu0 2
    %68 = vperm.xlu0 %67, %v37
    %v69 = vpop.permute.xlu0 %68
    %70 = vset.pattern.permute.xlu0 2
    %71 = vperm.xlu0 %70, %v38
    %v72 = vpop.permute.xlu0 %71
    %73 = vset.pattern.permute.xlu0 2
    %74 = vperm.xlu0 %73, %v39
    %v75 = vpop.permute.xlu0 %74
    %76 = vset.pattern.permute.xlu0 2
    %77 = vperm.xlu0 %76, %v40
    %v78 = vpop.permute.xlu0 %77
    %79 = vset.pattern.permute.xlu0 2
    %80 = vperm.xlu0 %79, %v41
    %v81 = vpop.permute.xlu0 %80
    %82 = vset.pattern.permute.xlu0 2
    %83 = vperm.xlu0 %82, %v42
    %v84 = vpop.permute.xlu0 %83
    %85 = vset.pattern.permute.xlu0 2
    %86 = vperm.xlu0 %85, %v43
    %v87 = vpop.permute.xlu0 %86
    %88 = vset.pattern.permute.xlu0 2
    %89 = vperm.xlu0 %88, %v44
    %v90 = vpop.permute.xlu0 %89
    %91 = vset.pattern.permute.xlu0 2
    %92 = vperm.xlu0 %91, %v45
    %v93 = vpop.permute.xlu0 %92
    %vm94 = vcmp.eq.s32.totalorder %v29, %v48
    %vm95 = vcmp.eq.s32.totalorder %v29, %v51
    %vm96 = vcmp.eq.s32.totalorder %v29, %v54
    %vm97 = vcmp.eq.s32.totalorder %v29, %v57
    %vm98 = vcmp.eq.s32.totalorder %v29, %v60
    %vm99 = vcmp.eq.s32.totalorder %v29, %v63
    %vm100 = vcmp.eq.s32.totalorder %v29, %v66
    %vm101 = vcmp.eq.s32.totalorder %v29, %v69
    %vm102 = vcmp.eq.s32.totalorder %v29, %v72
    %vm103 = vcmp.eq.s32.totalorder %v29, %v75
    %vm104 = vcmp.eq.s32.totalorder %v29, %v78
    %vm105 = vcmp.eq.s32.totalorder %v29, %v81
    %vm106 = vcmp.eq.s32.totalorder %v29, %v84
    %vm107 = vcmp.eq.s32.totalorder %v29, %v87
    %vm108 = vcmp.eq.s32.totalorder %v29, %v90
    %vm109 = vcmp.eq.s32.totalorder %v29, %v93
    %v110 = vsel %vm94, 1, 0
    %v111 = vsel %vm95, 1, 0
    %v112 = vsel %vm96, 1, 0
    %v113 = vsel %vm97, 1, 0
    %v114 = vsel %vm98, 1, 0
    %v115 = vsel %vm99, 1, 0
    %v116 = vsel %vm100, 1, 0
    %v117 = vsel %vm101, 1, 0
    %v118 = vsel %vm102, 1, 0
    %v119 = vsel %vm103, 1, 0
    %v120 = vsel %vm104, 1, 0
    %v121 = vsel %vm105, 1, 0
    %v122 = vsel %vm106, 1, 0
    %v123 = vsel %vm107, 1, 0
    %v124 = vsel %vm108, 1, 0
    %v125 = vsel %vm109, 1, 0
    %v126 = vcvt.s32.f32 %v110
    %v127 = vcvt.s32.f32 %v111
    %v128 = vcvt.s32.f32 %v112
    %v129 = vcvt.s32.f32 %v113
    %v130 = vcvt.s32.f32 %v114
    %v131 = vcvt.s32.f32 %v115
    %v132 = vcvt.s32.f32 %v116
    %v133 = vcvt.s32.f32 %v117
    %v134 = vcvt.s32.f32 %v118
    %v135 = vcvt.s32.f32 %v119
    %v136 = vcvt.s32.f32 %v120
    %v137 = vcvt.s32.f32 %v121
    %v138 = vcvt.s32.f32 %v122
    %v139 = vcvt.s32.f32 %v123
    %v140 = vcvt.s32.f32 %v124
    %v141 = vcvt.s32.f32 %v125
    %v142 = vadd.f32 %v126, 0.0
    %v143 = vadd.f32 %v127, 0.0
    %v144 = vadd.f32 %v128, 0.0
    %v145 = vadd.f32 %v129, 0.0
    %v146 = vadd.f32 %v130, 0.0
    %v147 = vadd.f32 %v131, 0.0
    %v148 = vadd.f32 %v132, 0.0
    %v149 = vadd.f32 %v133, 0.0
    %v150 = vadd.f32 %v134, 0.0
    %v151 = vadd.f32 %v135, 0.0
    %v152 = vadd.f32 %v136, 0.0
    %v153 = vadd.f32 %v137, 0.0
    %v154 = vadd.f32 %v138, 0.0
    %v155 = vadd.f32 %v139, 0.0
    %v156 = vadd.f32 %v140, 0.0
    %v157 = vadd.f32 %v141, 0.0
    %v158 = vadd.s32 %v30, 7
    %v159 = vadd.s32 %v31, 7
    %v160 = vadd.s32 %v32, 7
    %v161 = vadd.s32 %v33, 7
    %v162 = vadd.s32 %v34, 7
    %v163 = vadd.s32 %v35, 7
    %v164 = vadd.s32 %v36, 7
    %v165 = vadd.s32 %v37, 7
    %v166 = vadd.s32 %v38, 7
    %v167 = vadd.s32 %v39, 7
    %v168 = vadd.s32 %v40, 7
    %v169 = vadd.s32 %v41, 7
    %v170 = vadd.s32 %v42, 7
    %v171 = vadd.s32 %v43, 7
    %v172 = vadd.s32 %v44, 7
    %v173 = vadd.s32 %v45, 7
    %174 = vset.pattern.permute.xlu0 5
    %175 = vperm.xlu0 %174, %v158
    %v176 = vpop.permute.xlu0 %175
    %177 = vset.pattern.permute.xlu0 5
    %178 = vperm.xlu0 %177, %v159
    %v179 = vpop.permute.xlu0 %178
    %180 = vset.pattern.permute.xlu0 5
    %181 = vperm.xlu0 %180, %v160
    %v182 = vpop.permute.xlu0 %181
    %183 = vset.pattern.permute.xlu0 5
    %184 = vperm.xlu0 %183, %v161
    %v185 = vpop.permute.xlu0 %184
    %186 = vset.pattern.permute.xlu0 5
    %187 = vperm.xlu0 %186, %v162
    %v188 = vpop.permute.xlu0 %187
    %189 = vset.pattern.permute.xlu0 5
    %190 = vperm.xlu0 %189, %v163
    %v191 = vpop.permute.xlu0 %190
    %192 = vset.pattern.permute.xlu0 5
    %193 = vperm.xlu0 %192, %v164
    %v194 = vpop.permute.xlu0 %193
    %195 = vset.pattern.permute.xlu0 5
    %196 = vperm.xlu0 %195, %v165
    %v197 = vpop.permute.xlu0 %196
    %198 = vset.pattern.permute.xlu0 5
    %199 = vperm.xlu0 %198, %v166
    %v200 = vpop.permute.xlu0 %199
    %201 = vset.pattern.permute.xlu0 5
    %202 = vperm.xlu0 %201, %v167
    %v203 = vpop.permute.xlu0 %202
    %204 = vset.pattern.permute.xlu0 5
    %205 = vperm.xlu0 %204, %v168
    %v206 = vpop.permute.xlu0 %205
    %207 = vset.pattern.permute.xlu0 5
    %208 = vperm.xlu0 %207, %v169
    %v209 = vpop.permute.xlu0 %208
    %210 = vset.pattern.permute.xlu0 5
    %211 = vperm.xlu0 %210, %v170
    %v212 = vpop.permute.xlu0 %211
    %213 = vset.pattern.permute.xlu0 5
    %214 = vperm.xlu0 %213, %v171
    %v215 = vpop.permute.xlu0 %214
    %216 = vset.pattern.permute.xlu0 5
    %217 = vperm.xlu0 %216, %v172
    %v218 = vpop.permute.xlu0 %217
    %219 = vset.pattern.permute.xlu0 5
    %220 = vperm.xlu0 %219, %v173
    %v221 = vpop.permute.xlu0 %220
    %vm222 = vcmp.eq.s32.totalorder %v29, %v176
    %vm223 = vcmp.eq.s32.totalorder %v29, %v179
    %vm224 = vcmp.eq.s32.totalorder %v29, %v182
    %vm225 = vcmp.eq.s32.totalorder %v29, %v185
    %vm226 = vcmp.eq.s32.totalorder %v29, %v188
    %vm227 = vcmp.eq.s32.totalorder %v29, %v191
    %vm228 = vcmp.eq.s32.totalorder %v29, %v194
    %vm229 = vcmp.eq.s32.totalorder %v29, %v197
    %vm230 = vcmp.eq.s32.totalorder %v29, %v200
    %vm231 = vcmp.eq.s32.totalorder %v29, %v203
    %vm232 = vcmp.eq.s32.totalorder %v29, %v206
    %vm233 = vcmp.eq.s32.totalorder %v29, %v209
    %vm234 = vcmp.eq.s32.totalorder %v29, %v212
    %vm235 = vcmp.eq.s32.totalorder %v29, %v215
    %vm236 = vcmp.eq.s32.totalorder %v29, %v218
    %vm237 = vcmp.eq.s32.totalorder %v29, %v221
    %v238 = vsel %vm222, 1, 0
    %v239 = vsel %vm223, 1, 0
    %v240 = vsel %vm224, 1, 0
    %v241 = vsel %vm225, 1, 0
    %v242 = vsel %vm226, 1, 0
    %v243 = vsel %vm227, 1, 0
    %v244 = vsel %vm228, 1, 0
    %v245 = vsel %vm229, 1, 0
    %v246 = vsel %vm230, 1, 0
    %v247 = vsel %vm231, 1, 0
    %v248 = vsel %vm232, 1, 0
    %v249 = vsel %vm233, 1, 0
    %v250 = vsel %vm234, 1, 0
    %v251 = vsel %vm235, 1, 0
    %v252 = vsel %vm236, 1, 0
    %v253 = vsel %vm237, 1, 0
    %v254 = vcvt.s32.f32 %v238
    %v255 = vcvt.s32.f32 %v239
    %v256 = vcvt.s32.f32 %v240
    %v257 = vcvt.s32.f32 %v241
    %v258 = vcvt.s32.f32 %v242
    %v259 = vcvt.s32.f32 %v243
    %v260 = vcvt.s32.f32 %v244
    %v261 = vcvt.s32.f32 %v245
    %v262 = vcvt.s32.f32 %v246
    %v263 = vcvt.s32.f32 %v247
    %v264 = vcvt.s32.f32 %v248
    %v265 = vcvt.s32.f32 %v249
    %v266 = vcvt.s32.f32 %v250
    %v267 = vcvt.s32.f32 %v251
    %v268 = vcvt.s32.f32 %v252
    %v269 = vcvt.s32.f32 %v253
    %v270 = vadd.f32 %v142, %v254
    %v271 = vadd.f32 %v143, %v255
    %v272 = vadd.f32 %v144, %v256
    %v273 = vadd.f32 %v145, %v257
    %v274 = vadd.f32 %v146, %v258
    %v275 = vadd.f32 %v147, %v259
    %v276 = vadd.f32 %v148, %v260
    %v277 = vadd.f32 %v149, %v261
    %v278 = vadd.f32 %v150, %v262
    %v279 = vadd.f32 %v151, %v263
    %v280 = vadd.f32 %v152, %v264
    %v281 = vadd.f32 %v153, %v265
    %v282 = vadd.f32 %v154, %v266
    %v283 = vadd.f32 %v155, %v267
    %v284 = vadd.f32 %v156, %v268
    %v285 = vadd.f32 %v157, %v269
    %v286 = vadd.s32 %v30, 20
    %v287 = vadd.s32 %v31, 20
    %v288 = vadd.s32 %v32, 20
    %v289 = vadd.s32 %v33, 20
    %v290 = vadd.s32 %v34, 20
    %v291 = vadd.s32 %v35, 20
    %v292 = vadd.s32 %v36, 20
    %v293 = vadd.s32 %v37, 20
    %v294 = vadd.s32 %v38, 20
    %v295 = vadd.s32 %v39, 20
    %v296 = vadd.s32 %v40, 20
    %v297 = vadd.s32 %v41, 20
    %v298 = vadd.s32 %v42, 20
    %v299 = vadd.s32 %v43, 20
    %v300 = vadd.s32 %v44, 20
    %v301 = vadd.s32 %v45, 20
    %302 = vset.pattern.permute.xlu0 11
    %303 = vperm.xlu0 %302, %v286
    %v304 = vpop.permute.xlu0 %303
    %305 = vset.pattern.permute.xlu0 11
    %306 = vperm.xlu0 %305, %v287
    %v307 = vpop.permute.xlu0 %306
    %308 = vset.pattern.permute.xlu0 11
    %309 = vperm.xlu0 %308, %v288
    %v310 = vpop.permute.xlu0 %309
    %311 = vset.pattern.permute.xlu0 11
    %312 = vperm.xlu0 %311, %v289
    %v313 = vpop.permute.xlu0 %312
    %314 = vset.pattern.permute.xlu0 11
    %315 = vperm.xlu0 %314, %v290
    %v316 = vpop.permute.xlu0 %315
    %317 = vset.pattern.permute.xlu0 11
    %318 = vperm.xlu0 %317, %v291
    %v319 = vpop.permute.xlu0 %318
    %320 = vset.pattern.permute.xlu0 11
    %321 = vperm.xlu0 %320, %v292
    %v322 = vpop.permute.xlu0 %321
    %323 = vset.pattern.permute.xlu0 11
    %324 = vperm.xlu0 %323, %v293
    %v325 = vpop.permute.xlu0 %324
    %326 = vset.pattern.permute.xlu0 11
    %327 = vperm.xlu0 %326, %v294
    %v328 = vpop.permute.xlu0 %327
    %329 = vset.pattern.permute.xlu0 11
    %330 = vperm.xlu0 %329, %v295
    %v331 = vpop.permute.xlu0 %330
    %332 = vset.pattern.permute.xlu0 11
    %333 = vperm.xlu0 %332, %v296
    %v334 = vpop.permute.xlu0 %333
    %335 = vset.pattern.permute.xlu0 11
    %336 = vperm.xlu0 %335, %v297
    %v337 = vpop.permute.xlu0 %336
    %338 = vset.pattern.permute.xlu0 11
    %339 = vperm.xlu0 %338, %v298
    %v340 = vpop.permute.xlu0 %339
    %341 = vset.pattern.permute.xlu0 11
    %342 = vperm.xlu0 %341, %v299
    %v343 = vpop.permute.xlu0 %342
    %344 = vset.pattern.permute.xlu0 11
    %345 = vperm.xlu0 %344, %v300
    %v346 = vpop.permute.xlu0 %345
    %347 = vset.pattern.permute.xlu0 11
    %348 = vperm.xlu0 %347, %v301
    %v349 = vpop.permute.xlu0 %348
    %vm350 = vcmp.eq.s32.totalorder %v29, %v304
    %vm351 = vcmp.eq.s32.totalorder %v29, %v307
    %vm352 = vcmp.eq.s32.totalorder %v29, %v310
    %vm353 = vcmp.eq.s32.totalorder %v29, %v313
    %vm354 = vcmp.eq.s32.totalorder %v29, %v316
    %vm355 = vcmp.eq.s32.totalorder %v29, %v319
    %vm356 = vcmp.eq.s32.totalorder %v29, %v322
    %vm357 = vcmp.eq.s32.totalorder %v29, %v325
    %vm358 = vcmp.eq.s32.totalorder %v29, %v328
    %vm359 = vcmp.eq.s32.totalorder %v29, %v331
    %vm360 = vcmp.eq.s32.totalorder %v29, %v334
    %vm361 = vcmp.eq.s32.totalorder %v29, %v337
    %vm362 = vcmp.eq.s32.totalorder %v29, %v340
    %vm363 = vcmp.eq.s32.totalorder %v29, %v343
    %vm364 = vcmp.eq.s32.totalorder %v29, %v346
    %vm365 = vcmp.eq.s32.totalorder %v29, %v349
    %v366 = vsel %vm350, 1, 0
    %v367 = vsel %vm351, 1, 0
    %v368 = vsel %vm352, 1, 0
    %v369 = vsel %vm353, 1, 0
    %v370 = vsel %vm354, 1, 0
    %v371 = vsel %vm355, 1, 0
    %v372 = vsel %vm356, 1, 0
    %v373 = vsel %vm357, 1, 0
    %v374 = vsel %vm358, 1, 0
    %v375 = vsel %vm359, 1, 0
    %v376 = vsel %vm360, 1, 0
    %v377 = vsel %vm361, 1, 0
    %v378 = vsel %vm362, 1, 0
    %v379 = vsel %vm363, 1, 0
    %v380 = vsel %vm364, 1, 0
    %v381 = vsel %vm365, 1, 0
    %v382 = vcvt.s32.f32 %v366
    %v383 = vcvt.s32.f32 %v367
    %v384 = vcvt.s32.f32 %v368
    %v385 = vcvt.s32.f32 %v369
    %v386 = vcvt.s32.f32 %v370
    %v387 = vcvt.s32.f32 %v371
    %v388 = vcvt.s32.f32 %v372
    %v389 = vcvt.s32.f32 %v373
    %v390 = vcvt.s32.f32 %v374
    %v391 = vcvt.s32.f32 %v375
    %v392 = vcvt.s32.f32 %v376
    %v393 = vcvt.s32.f32 %v377
    %v394 = vcvt.s32.f32 %v378
    %v395 = vcvt.s32.f32 %v379
    %v396 = vcvt.s32.f32 %v380
    %v397 = vcvt.s32.f32 %v381
    %v398 = vadd.f32 %v270, %v382
    %v399 = vadd.f32 %v271, %v383
    %v400 = vadd.f32 %v272, %v384
    %v401 = vadd.f32 %v273, %v385
    %v402 = vadd.f32 %v274, %v386
    %v403 = vadd.f32 %v275, %v387
    %v404 = vadd.f32 %v276, %v388
    %v405 = vadd.f32 %v277, %v389
    %v406 = vadd.f32 %v278, %v390
    %v407 = vadd.f32 %v279, %v391
    %v408 = vadd.f32 %v280, %v392
    %v409 = vadd.f32 %v281, %v393
    %v410 = vadd.f32 %v282, %v394
    %v411 = vadd.f32 %v283, %v395
    %v412 = vadd.f32 %v284, %v396
    %v413 = vadd.f32 %v285, %v397
    %v414 = vld [vmem:[%s1] sm:$0xff]
    %v415 = vld [vmem:[%s1 + $0x8] sm:$0xff]
    %v416 = vld [vmem:[%s1 + $0x10] sm:$0xff]
    %v417 = vld [vmem:[%s1 + $0x18] sm:$0x1]
    %vm418 = vcmask 203776
    %v420 = vsel %vm418, %v398, 0
    %v423 = vsel %vm418, %v399, 0
    %v426 = vsel %vm418, %v400, 0
    %v429 = vsel %vm418, %v401, 0
    %v432 = vsel %vm418, %v402, 0
    %v435 = vsel %vm418, %v403, 0
    %v438 = vsel %vm418, %v404, 0
    %v441 = vsel %vm418, %v405, 0
    %v444 = vsel %vm418, %v406, 0
    %v447 = vsel %vm418, %v407, 0
    %v450 = vsel %vm418, %v408, 0
    %v453 = vsel %vm418, %v409, 0
    %v456 = vsel %vm418, %v410, 0
    %v459 = vsel %vm418, %v411, 0
    %v462 = vsel %vm418, %v412, 0
    %v465 = vsel %vm418, %v413, 0
    %vm467 = vcmask 1040384
    %v469 = vsel %vm467, %v417, 0
    %471 = vmatprep.subr.mxu0 0.0
    %472 = vmatpush1.msra.mxu0 %v414
    %473 = vmatprep.subr.mxu0 0.0
    %474 = vmatpush1.msra.mxu0 %v415
    %475 = vmatprep.subr.mxu0 0.0
    %476 = vmatpush1.msra.mxu0 %v416
    %477 = vmatprep.subr.mxu0 0.0
    %478 = vmatpush1.msra.mxu0 %v469
    %479 = vmatprep.subr.mxu0 0.0
    %480 = vmatpush1.msra.mxu0 0.0
    %481 = vmatprep.subr.mxu0 0.0
    %482 = vmatpush1.msra.mxu0 0.0
    %483 = vmatprep.subr.mxu0 0.0
    %484 = vmatpush1.msra.mxu0 0.0
    %485 = vmatprep.subr.mxu0 0.0
    %486 = vmatpush1.msra.mxu0 0.0
    %487 = vmatprep.subr.mxu0 0.0
    %488 = vmatpush1.msra.mxu0 0.0
    %489 = vmatprep.subr.mxu0 0.0
    %490 = vmatpush1.msra.mxu0 0.0
    %491 = vmatprep.subr.mxu0 0.0
    %492 = vmatpush1.msra.mxu0 0.0
    %493 = vmatprep.subr.mxu0 0.0
    %494 = vmatpush1.msra.mxu0 0.0
    %495 = vmatprep.subr.mxu0 0.0
    %496 = vmatpush1.msra.mxu0 0.0
    %497 = vmatprep.subr.mxu0 0.0
    %498 = vmatpush1.msra.mxu0 0.0
    %499 = vmatprep.subr.mxu0 0.0
    %500 = vmatpush1.msra.mxu0 0.0
    %501 = vmatprep.subr.mxu0 0.0
    %502 = vmatpush1.msra.mxu0 0.0
    %503 = vmatprep.subr.mxu0 0.0
    %504 = vmatpush1.msra.mxu0 0.0
    %505 = vmatprep.subr.mxu0 0.0
    %506 = vmatpush1.msra.mxu0 0.0
    %507 = vmatprep.subr.mxu0 0.0
    %508 = vmatpush1.msra.mxu0 0.0
    %509 = vmatprep.subr.mxu0 0.0
    %510 = vmatpush1.msra.mxu0 0.0
    %511 = vmatprep.subr.mxu0 0.0
    %512 = vmatpush1.msra.mxu0 0.0
    %513 = vmatprep.subr.mxu0 0.0
    %514 = vmatpush1.msra.mxu0 0.0
    %515 = vmatprep.subr.mxu0 0.0
    %516 = vmatpush1.msra.mxu0 0.0
    %517 = vmatprep.subr.mxu0 0.0
    %518 = vmatpush1.msra.mxu0 0.0
    %519 = vmatprep.subr.mxu0 0.0
    %520 = vmatpush1.msra.mxu0 0.0
    %521 = vmatprep.subr.mxu0 0.0
    %522 = vmatpush1.msra.mxu0 0.0
    %523 = vmatprep.subr.mxu0 0.0
    %524 = vmatpush1.msra.mxu0 0.0
    %525 = vmatprep.subr.mxu0 0.0
    %526 = vmatpush1.msra.mxu0 0.0
    %527 = vmatprep.subr.mxu0 0.0
    %528 = vmatpush1.msra.mxu0 0.0
    %529 = vmatprep.subr.mxu0 0.0
    %530 = vmatpush1.msra.mxu0 0.0
    %531 = vmatprep.subr.mxu0 0.0
    %532 = vmatpush1.msra.mxu0 0.0
    %533 = vmatprep.subr.mxu0 0.0
    %534 = vmatpush1.msra.mxu0 0.0
    %535 = vmatprep.mubr.f32.mxu0 0.0
    %536 = vmatmul.mubr.f32.gmra.mrb[0].mxu0 %v420
    %v537 = vpop.f32.mrb[0].mxu0
    %v538 = vadd.f32 0.0, %v537
    %v539 = vpop.f32.mrb[0].mxu0
    %540 = vmatprep.mubr.f32.mxu0 0.0
    %541 = vmatmul.mubr.f32.gmra.mrb[0].mxu0 %v423
    %v542 = vpop.f32.mrb[0].mxu0
    %v543 = vadd.f32 0.0, %v542
    %v544 = vpop.f32.mrb[0].mxu0
    %545 = vmatprep.mubr.f32.mxu0 0.0
    %546 = vmatmul.mubr.f32.gmra.mrb[0].mxu0 %v426
    %v547 = vpop.f32.mrb[0].mxu0
    %v548 = vadd.f32 0.0, %v547
    %v549 = vpop.f32.mrb[0].mxu0
    %550 = vmatprep.mubr.f32.mxu0 0.0
    %551 = vmatmul.mubr.f32.gmra.mrb[0].mxu0 %v429
    %v552 = vpop.f32.mrb[0].mxu0
    %v553 = vadd.f32 0.0, %v552
    %v554 = vpop.f32.mrb[0].mxu0
    %555 = vmatprep.mubr.f32.mxu0 0.0
    %556 = vmatmul.mubr.f32.gmra.mrb[0].mxu0 %v432
    %v557 = vpop.f32.mrb[0].mxu0
    %v558 = vadd.f32 0.0, %v557
    %v559 = vpop.f32.mrb[0].mxu0
    %560 = vmatprep.mubr.f32.mxu0 0.0
    %561 = vmatmul.mubr.f32.gmra.mrb[0].mxu0 %v435
    %v562 = vpop.f32.mrb[0].mxu0
    %v563 = vadd.f32 0.0, %v562
    %v564 = vpop.f32.mrb[0].mxu0
    %565 = vmatprep.mubr.f32.mxu0 0.0
    %566 = vmatmul.mubr.f32.gmra.mrb[0].mxu0 %v438
    %v567 = vpop.f32.mrb[0].mxu0
    %v568 = vadd.f32 0.0, %v567
    %v569 = vpop.f32.mrb[0].mxu0
    %570 = vmatprep.mubr.f32.mxu0 0.0
    %571 = vmatmul.mubr.f32.gmra.mrb[0].mxu0 %v441
    %v572 = vpop.f32.mrb[0].mxu0
    %v573 = vadd.f32 0.0, %v572
    %v574 = vpop.f32.mrb[0].mxu0
    %575 = vmatprep.mubr.f32.mxu0 0.0
    %576 = vmatmul.mubr.f32.gmra.mrb[0].mxu0 %v444
    %v577 = vpop.f32.mrb[0].mxu0
    %v578 = vadd.f32 0.0, %v577
    %v579 = vpop.f32.mrb[0].mxu0
    %580 = vmatprep.mubr.f32.mxu0 0.0
    %581 = vmatmul.mubr.f32.gmra.mrb[0].mxu0 %v447
    %v582 = vpop.f32.mrb[0].mxu0
    %v583 = vadd.f32 0.0, %v582
    %v584 = vpop.f32.mrb[0].mxu0
    %585 = vmatprep.mubr.f32.mxu0 0.0
    %586 = vmatmul.mubr.f32.gmra.mrb[0].mxu0 %v450
    %v587 = vpop.f32.mrb[0].mxu0
    %v588 = vadd.f32 0.0, %v587
    %v589 = vpop.f32.mrb[0].mxu0
    %590 = vmatprep.mubr.f32.mxu0 0.0
    %591 = vmatmul.mubr.f32.gmra.mrb[0].mxu0 %v453
    %v592 = vpop.f32.mrb[0].mxu0
    %v593 = vadd.f32 0.0, %v592
    %v594 = vpop.f32.mrb[0].mxu0
    %595 = vmatprep.mubr.f32.mxu0 0.0
    %596 = vmatmul.mubr.f32.gmra.mrb[0].mxu0 %v456
    %v597 = vpop.f32.mrb[0].mxu0
    %v598 = vadd.f32 0.0, %v597
    %v599 = vpop.f32.mrb[0].mxu0
    %600 = vmatprep.mubr.f32.mxu0 0.0
    %601 = vmatmul.mubr.f32.gmra.mrb[0].mxu0 %v459
    %v602 = vpop.f32.mrb[0].mxu0
    %v603 = vadd.f32 0.0, %v602
    %v604 = vpop.f32.mrb[0].mxu0
    %605 = vmatprep.mubr.f32.mxu0 0.0
    %606 = vmatmul.mubr.f32.gmra.mrb[0].mxu0 %v462
    %v607 = vpop.f32.mrb[0].mxu0
    %v608 = vadd.f32 0.0, %v607
    %v609 = vpop.f32.mrb[0].mxu0
    %610 = vmatprep.mubr.f32.mxu0 0.0
    %611 = vmatmul.mubr.f32.gmra.mrb[0].mxu0 %v465
    %v612 = vpop.f32.mrb[0].mxu0
    %v613 = vadd.f32 0.0, %v612
    %v614 = vpop.f32.mrb[0].mxu0
    %615 = vdwg.mxu0
    %632 = vrot.lane.b32.xlu0 %v538, 2
    %v633 = vpop.permute.xlu0 %632
    %634 = vrot.lane.b32.xlu0 %v543, 2
    %v635 = vpop.permute.xlu0 %634
    %636 = vrot.lane.b32.xlu0 %v548, 2
    %v637 = vpop.permute.xlu0 %636
    %638 = vrot.lane.b32.xlu0 %v553, 2
    %v639 = vpop.permute.xlu0 %638
    %640 = vrot.lane.b32.xlu0 %v558, 2
    %v641 = vpop.permute.xlu0 %640
    %642 = vrot.lane.b32.xlu0 %v563, 2
    %v643 = vpop.permute.xlu0 %642
    %644 = vrot.lane.b32.xlu0 %v568, 2
    %v645 = vpop.permute.xlu0 %644
    %646 = vrot.lane.b32.xlu0 %v573, 2
    %v647 = vpop.permute.xlu0 %646
    %648 = vrot.lane.b32.xlu0 %v578, 2
    %v649 = vpop.permute.xlu0 %648
    %650 = vrot.lane.b32.xlu0 %v583, 2
    %v651 = vpop.permute.xlu0 %650
    %652 = vrot.lane.b32.xlu0 %v588, 2
    %v653 = vpop.permute.xlu0 %652
    %654 = vrot.lane.b32.xlu0 %v593, 2
    %v655 = vpop.permute.xlu0 %654
    %656 = vrot.lane.b32.xlu0 %v598, 2
    %v657 = vpop.permute.xlu0 %656
    %658 = vrot.lane.b32.xlu0 %v603, 2
    %v659 = vpop.permute.xlu0 %658
    %660 = vrot.lane.b32.xlu0 %v608, 2
    %v661 = vpop.permute.xlu0 %660
    %662 = vrot.lane.b32.xlu0 %v613, 2
    %v663 = vpop.permute.xlu0 %662
    %696 = vrot.lane.b32.xlu0 %v12, 2
    %v697 = vpop.permute.xlu0 %696
    %698 = vrot.lane.b32.xlu0 %v13, 2
    %v699 = vpop.permute.xlu0 %698
    %700 = vrot.lane.b32.xlu0 %v14, 2
    %v701 = vpop.permute.xlu0 %700
    %702 = vrot.lane.b32.xlu0 %v15, 2
    %v703 = vpop.permute.xlu0 %702
    %704 = vrot.lane.b32.xlu0 %v16, 2
    %v705 = vpop.permute.xlu0 %704
    %706 = vrot.lane.b32.xlu0 %v17, 2
    %v707 = vpop.permute.xlu0 %706
    %708 = vrot.lane.b32.xlu0 %v18, 2
    %v709 = vpop.permute.xlu0 %708
    %710 = vrot.lane.b32.xlu0 %v19, 2
    %v711 = vpop.permute.xlu0 %710
    %712 = vrot.lane.b32.xlu0 %v20, 2
    %v713 = vpop.permute.xlu0 %712
    %714 = vrot.lane.b32.xlu0 %v21, 2
    %v715 = vpop.permute.xlu0 %714
    %716 = vrot.lane.b32.xlu0 %v22, 2
    %v717 = vpop.permute.xlu0 %716
    %718 = vrot.lane.b32.xlu0 %v23, 2
    %v719 = vpop.permute.xlu0 %718
    %720 = vrot.lane.b32.xlu0 %v24, 2
    %v721 = vpop.permute.xlu0 %720
    %722 = vrot.lane.b32.xlu0 %v25, 2
    %v723 = vpop.permute.xlu0 %722
    %724 = vrot.lane.b32.xlu0 %v26, 2
    %v725 = vpop.permute.xlu0 %724
    %726 = vrot.lane.b32.xlu0 %v27, 2
    %v727 = vpop.permute.xlu0 %726
    %744 = vrot.lane.b32.xlu0 %v538, 4
    %v745 = vpop.permute.xlu0 %744
    %746 = vrot.lane.b32.xlu0 %v543, 4
    %v747 = vpop.permute.xlu0 %746
    %748 = vrot.lane.b32.xlu0 %v548, 4
    %v749 = vpop.permute.xlu0 %748
    %750 = vrot.lane.b32.xlu0 %v553, 4
    %v751 = vpop.permute.xlu0 %750
    %752 = vrot.lane.b32.xlu0 %v558, 4
    %v753 = vpop.permute.xlu0 %752
    %754 = vrot.lane.b32.xlu0 %v563, 4
    %v755 = vpop.permute.xlu0 %754
    %756 = vrot.lane.b32.xlu0 %v568, 4
    %v757 = vpop.permute.xlu0 %756
    %758 = vrot.lane.b32.xlu0 %v573, 4
    %v759 = vpop.permute.xlu0 %758
    %760 = vrot.lane.b32.xlu0 %v578, 4
    %v761 = vpop.permute.xlu0 %760
    %762 = vrot.lane.b32.xlu0 %v583, 4
    %v763 = vpop.permute.xlu0 %762
    %764 = vrot.lane.b32.xlu0 %v588, 4
    %v765 = vpop.permute.xlu0 %764
    %766 = vrot.lane.b32.xlu0 %v593, 4
    %v767 = vpop.permute.xlu0 %766
    %768 = vrot.lane.b32.xlu0 %v598, 4
    %v769 = vpop.permute.xlu0 %768
    %770 = vrot.lane.b32.xlu0 %v603, 4
    %v771 = vpop.permute.xlu0 %770
    %772 = vrot.lane.b32.xlu0 %v608, 4
    %v773 = vpop.permute.xlu0 %772
    %774 = vrot.lane.b32.xlu0 %v613, 4
    %v775 = vpop.permute.xlu0 %774
    %792 = vrot.lane.b32.xlu0 %v12, 5
    %v793 = vpop.permute.xlu0 %792
    %794 = vrot.lane.b32.xlu0 %v13, 5
    %v795 = vpop.permute.xlu0 %794
    %796 = vrot.lane.b32.xlu0 %v14, 5
    %v797 = vpop.permute.xlu0 %796
    %798 = vrot.lane.b32.xlu0 %v15, 5
    %v799 = vpop.permute.xlu0 %798
    %800 = vrot.lane.b32.xlu0 %v16, 5
    %v801 = vpop.permute.xlu0 %800
    %802 = vrot.lane.b32.xlu0 %v17, 5
    %v803 = vpop.permute.xlu0 %802
    %804 = vrot.lane.b32.xlu0 %v18, 5
    %v805 = vpop.permute.xlu0 %804
    %806 = vrot.lane.b32.xlu0 %v19, 5
    %v807 = vpop.permute.xlu0 %806
    %808 = vrot.lane.b32.xlu0 %v20, 5
    %v809 = vpop.permute.xlu0 %808
    %810 = vrot.lane.b32.xlu0 %v21, 5
    %v811 = vpop.permute.xlu0 %810
    %812 = vrot.lane.b32.xlu0 %v22, 5
    %v813 = vpop.permute.xlu0 %812
    %814 = vrot.lane.b32.xlu0 %v23, 5
    %v815 = vpop.permute.xlu0 %814
    %816 = vrot.lane.b32.xlu0 %v24, 5
    %v817 = vpop.permute.xlu0 %816
    %818 = vrot.lane.b32.xlu0 %v25, 5
    %v819 = vpop.permute.xlu0 %818
    %820 = vrot.lane.b32.xlu0 %v26, 5
    %v821 = vpop.permute.xlu0 %820
    %822 = vrot.lane.b32.xlu0 %v27, 5
    %v823 = vpop.permute.xlu0 %822
    %840 = vrot.lane.b32.xlu0 %v538, 9
    %v841 = vpop.permute.xlu0 %840
    %842 = vrot.lane.b32.xlu0 %v543, 9
    %v843 = vpop.permute.xlu0 %842
    %844 = vrot.lane.b32.xlu0 %v548, 9
    %v845 = vpop.permute.xlu0 %844
    %846 = vrot.lane.b32.xlu0 %v553, 9
    %v847 = vpop.permute.xlu0 %846
    %848 = vrot.lane.b32.xlu0 %v558, 9
    %v849 = vpop.permute.xlu0 %848
    %850 = vrot.lane.b32.xlu0 %v563, 9
    %v851 = vpop.permute.xlu0 %850
    %852 = vrot.lane.b32.xlu0 %v568, 9
    %v853 = vpop.permute.xlu0 %852
    %854 = vrot.lane.b32.xlu0 %v573, 9
    %v855 = vpop.permute.xlu0 %854
    %856 = vrot.lane.b32.xlu0 %v578, 9
    %v857 = vpop.permute.xlu0 %856
    %858 = vrot.lane.b32.xlu0 %v583, 9
    %v859 = vpop.permute.xlu0 %858
    %860 = vrot.lane.b32.xlu0 %v588, 9
    %v861 = vpop.permute.xlu0 %860
    %862 = vrot.lane.b32.xlu0 %v593, 9
    %v863 = vpop.permute.xlu0 %862
    %864 = vrot.lane.b32.xlu0 %v598, 9
    %v865 = vpop.permute.xlu0 %864
    %866 = vrot.lane.b32.xlu0 %v603, 9
    %v867 = vpop.permute.xlu0 %866
    %868 = vrot.lane.b32.xlu0 %v608, 9
    %v869 = vpop.permute.xlu0 %868
    %870 = vrot.lane.b32.xlu0 %v613, 9
    %v871 = vpop.permute.xlu0 %870
    %888 = vrot.lane.b32.xlu0 %v12, 6
    %v889 = vpop.permute.xlu0 %888
    %890 = vrot.lane.b32.xlu0 %v13, 6
    %v891 = vpop.permute.xlu0 %890
    %892 = vrot.lane.b32.xlu0 %v14, 6
    %v893 = vpop.permute.xlu0 %892
    %894 = vrot.lane.b32.xlu0 %v15, 6
    %v895 = vpop.permute.xlu0 %894
    %896 = vrot.lane.b32.xlu0 %v16, 6
    %v897 = vpop.permute.xlu0 %896
    %898 = vrot.lane.b32.xlu0 %v17, 6
    %v899 = vpop.permute.xlu0 %898
    %900 = vrot.lane.b32.xlu0 %v18, 6
    %v901 = vpop.permute.xlu0 %900
    %902 = vrot.lane.b32.xlu0 %v19, 6
    %v903 = vpop.permute.xlu0 %902
    %904 = vrot.lane.b32.xlu0 %v20, 6
    %v905 = vpop.permute.xlu0 %904
    %906 = vrot.lane.b32.xlu0 %v21, 6
    %v907 = vpop.permute.xlu0 %906
    %908 = vrot.lane.b32.xlu0 %v22, 6
    %v909 = vpop.permute.xlu0 %908
    %910 = vrot.lane.b32.xlu0 %v23, 6
    %v911 = vpop.permute.xlu0 %910
    %912 = vrot.lane.b32.xlu0 %v24, 6
    %v913 = vpop.permute.xlu0 %912
    %914 = vrot.lane.b32.xlu0 %v25, 6
    %v915 = vpop.permute.xlu0 %914
    %916 = vrot.lane.b32.xlu0 %v26, 6
    %v917 = vpop.permute.xlu0 %916
    %918 = vrot.lane.b32.xlu0 %v27, 6
    %v919 = vpop.permute.xlu0 %918
    %vm936 = vcmask 15360
    %v937 = vsel %vm936, %v12, %v633
    %v938 = vsel %vm936, %v13, %v635
    %v939 = vsel %vm936, %v14, %v637
    %v940 = vsel %vm936, %v15, %v639
    %v941 = vsel %vm936, %v16, %v641
    %v942 = vsel %vm936, %v17, %v643
    %v943 = vsel %vm936, %v18, %v645
    %v944 = vsel %vm936, %v19, %v647
    %v945 = vsel %vm936, %v20, %v649
    %v946 = vsel %vm936, %v21, %v651
    %v947 = vsel %vm936, %v22, %v653
    %v948 = vsel %vm936, %v23, %v655
    %v949 = vsel %vm936, %v24, %v657
    %v950 = vsel %vm936, %v25, %v659
    %v951 = vsel %vm936, %v26, %v661
    %v952 = vsel %vm936, %v27, %v663
    %vm953 = vcmask 39936
    %v954 = vsel %vm953, %v937, %v697
    %v955 = vsel %vm953, %v938, %v699
    %v956 = vsel %vm953, %v939, %v701
    %v957 = vsel %vm953, %v940, %v703
    %v958 = vsel %vm953, %v941, %v705
    %v959 = vsel %vm953, %v942, %v707
    %v960 = vsel %vm953, %v943, %v709
    %v961 = vsel %vm953, %v944, %v711
    %v962 = vsel %vm953, %v945, %v713
    %v963 = vsel %vm953, %v946, %v715
    %v964 = vsel %vm953, %v947, %v717
    %v965 = vsel %vm953, %v948, %v719
    %v966 = vsel %vm953, %v949, %v721
    %v967 = vsel %vm953, %v950, %v723
    %v968 = vsel %vm953, %v951, %v725
    %v969 = vsel %vm953, %v952, %v727
    %vm970 = vcmask 56320
    %v971 = vsel %vm970, %v954, %v745
    %v972 = vsel %vm970, %v955, %v747
    %v973 = vsel %vm970, %v956, %v749
    %v974 = vsel %vm970, %v957, %v751
    %v975 = vsel %vm970, %v958, %v753
    %v976 = vsel %vm970, %v959, %v755
    %v977 = vsel %vm970, %v960, %v757
    %v978 = vsel %vm970, %v961, %v759
    %v979 = vsel %vm970, %v962, %v761
    %v980 = vsel %vm970, %v963, %v763
    %v981 = vsel %vm970, %v964, %v765
    %v982 = vsel %vm970, %v965, %v767
    %v983 = vsel %vm970, %v966, %v769
    %v984 = vsel %vm970, %v967, %v771
    %v985 = vsel %vm970, %v968, %v773
    %v986 = vsel %vm970, %v969, %v775
    %vm987 = vcmask 89088
    %v988 = vsel %vm987, %v971, %v793
    %v989 = vsel %vm987, %v972, %v795
    %v990 = vsel %vm987, %v973, %v797
    %v991 = vsel %vm987, %v974, %v799
    %v992 = vsel %vm987, %v975, %v801
    %v993 = vsel %vm987, %v976, %v803
    %v994 = vsel %vm987, %v977, %v805
    %v995 = vsel %vm987, %v978, %v807
    %v996 = vsel %vm987, %v979, %v809
    %v997 = vsel %vm987, %v980, %v811
    %v998 = vsel %vm987, %v981, %v813
    %v999 = vsel %vm987, %v982, %v815
    %v1000 = vsel %vm987, %v983, %v817
    %v1001 = vsel %vm987, %v984, %v819
    %v1002 = vsel %vm987, %v985, %v821
    %v1003 = vsel %vm987, %v986, %v823
    %vm1004 = vcmask 130048
    %v1005 = vsel %vm1004, %v988, %v841
    %v1006 = vsel %vm1004, %v989, %v843
    %v1007 = vsel %vm1004, %v990, %v845
    %v1008 = vsel %vm1004, %v991, %v847
    %v1009 = vsel %vm1004, %v992, %v849
    %v1010 = vsel %vm1004, %v993, %v851
    %v1011 = vsel %vm1004, %v994, %v853
    %v1012 = vsel %vm1004, %v995, %v855
    %v1013 = vsel %vm1004, %v996, %v857
    %v1014 = vsel %vm1004, %v997, %v859
    %v1015 = vsel %vm1004, %v998, %v861
    %v1016 = vsel %vm1004, %v999, %v863
    %v1017 = vsel %vm1004, %v1000, %v865
    %v1018 = vsel %vm1004, %v1001, %v867
    %v1019 = vsel %vm1004, %v1002, %v869
    %v1020 = vsel %vm1004, %v1003, %v871
    %vm1021 = vcmask 146432
    %v1022 = vsel %vm1021, %v1005, %v889
    %v1023 = vsel %vm1021, %v1006, %v891
    %v1024 = vsel %vm1021, %v1007, %v893
    %v1025 = vsel %vm1021, %v1008, %v895
    %v1026 = vsel %vm1021, %v1009, %v897
    %v1027 = vsel %vm1021, %v1010, %v899
    %v1028 = vsel %vm1021, %v1011, %v901
    %v1029 = vsel %vm1021, %v1012, %v903
    %v1030 = vsel %vm1021, %v1013, %v905
    %v1031 = vsel %vm1021, %v1014, %v907
    %v1032 = vsel %vm1021, %v1015, %v909
    %v1033 = vsel %vm1021, %v1016, %v911
    %v1034 = vsel %vm1021, %v1017, %v913
    %v1035 = vsel %vm1021, %v1018, %v915
    %v1036 = vsel %vm1021, %v1019, %v917
    %v1037 = vsel %vm1021, %v1020, %v919
    %vm1038 = vcmask 179200
    %v1039 = vsel %vm1038, %v1022, 0.0
    %v1040 = vsel %vm1038, %v1023, 0.0
    %v1041 = vsel %vm1038, %v1024, 0.0
    %v1042 = vsel %vm1038, %v1025, 0.0
    %v1043 = vsel %vm1038, %v1026, 0.0
    %v1044 = vsel %vm1038, %v1027, 0.0
    %v1045 = vsel %vm1038, %v1028, 0.0
    %v1046 = vsel %vm1038, %v1029, 0.0
    %v1047 = vsel %vm1038, %v1030, 0.0
    %v1048 = vsel %vm1038, %v1031, 0.0
    %v1049 = vsel %vm1038, %v1032, 0.0
    %v1050 = vsel %vm1038, %v1033, 0.0
    %v1051 = vsel %vm1038, %v1034, 0.0
    %v1052 = vsel %vm1038, %v1035, 0.0
    %v1053 = vsel %vm1038, %v1036, 0.0
    %v1054 = vsel %vm1038, %v1037, 0.0
    %1055 = vst [vmem:[#allocation2] sm:$0xff] %v1039
    %1056 = vst [vmem:[#allocation2 + $0x8] sm:$0xff] %v1040
    %1057 = vst [vmem:[#allocation2 + $0x10] sm:$0xff] %v1041
    %1058 = vst [vmem:[#allocation2 + $0x18] sm:$0xff] %v1042
    %1059 = vst [vmem:[#allocation2 + $0x20] sm:$0xff] %v1043
    %1060 = vst [vmem:[#allocation2 + $0x28] sm:$0xff] %v1044
    %1061 = vst [vmem:[#allocation2 + $0x30] sm:$0xff] %v1045
    %1062 = vst [vmem:[#allocation2 + $0x38] sm:$0xff] %v1046
    %1063 = vst [vmem:[#allocation2 + $0x40] sm:$0xff] %v1047
    %1064 = vst [vmem:[#allocation2 + $0x48] sm:$0xff] %v1048
    %1065 = vst [vmem:[#allocation2 + $0x50] sm:$0xff] %v1049
    %1066 = vst [vmem:[#allocation2 + $0x58] sm:$0xff] %v1050
    %1067 = vst [vmem:[#allocation2 + $0x60] sm:$0xff] %v1051
    %1068 = vst [vmem:[#allocation2 + $0x68] sm:$0xff] %v1052
    %1069 = vst [vmem:[#allocation2 + $0x70] sm:$0xff] %v1053
    %1070 = vst [vmem:[#allocation2 + $0x78] sm:$0xff] %v1054
    // Predicated region
    $region10: #{tpu_custom_call.1} parent=1 // pred_check
      _
    $region11: #{tpu_custom_call.1} parent=1 // pred_check_branch
      %1072 = sbr.rel (0) target = $region13
    $region12: #{tpu_custom_call.1} parent=1 // pred_region
      %s1074 = ssub.s32 2048, 2048
      %1075 = vsyncadd [#allocation3], %s1074
      %s1076 = sshll.u32 [#allocation2], 4
      %s1077 = int_to_ptr.vmem [resolvable:$true] %s1076
      %1082 = dma.vmem_to_hbm [thread:$0]  %s1077, 2048, %s2, [#allocation3], 128, 128, 8
    $region13: #{tpu_custom_call.1} parent=1 // pred_fallthru
      _
    // Predicated region
    $region14: #{tpu_custom_call.1} parent=1 // pred_check
      _
    $region15: #{tpu_custom_call.1} parent=1 // pred_check_branch
      %1084 = sbr.rel (0) target = $region17
    $region16: #{tpu_custom_call.1} parent=1 // pred_region
      %1085 = dma.done [#allocation3], 2048
    $region17: #{tpu_custom_call.1} parent=1 // pred_fallthru
      _
    %1086 = vsyncpa [#allocation3], 1

</llo_original>
